<compile_context>
chip_gen: v7x
topology: tpu7x:2x2x1
jax: 0.10.0
libtpu: 0.0.40
codegen_flags: <defaults>
</compile_context>

<pallas_src>
import numpy as np
import jax
import jax.numpy as jnp
from jax.experimental import pallas as pl
from jax.experimental.pallas import tpu as pltpu

LANE = 128          # vreg lane width
_ROW_GROUP = 64     # rows per in-kernel register sub-tile (tm is a multiple)
_TM_CAP = 512       # default row-tile cap
_TK_CAP = 4096      # default K-tile cap  (512 x 4096 f32 block = 8 MiB)


def _round_up(x, m):
    return ((x + m - 1) // m) * m


def _make_logden_kernel(tm, tk, k_total):
    """Streaming kernel: acc(tm,128) += fold(exp(neg tile)); log-reduce at end."""
    chunk_w = 256 if (tk % 256 == 0) else LANE
    n_chunks = tk // chunk_w
    n_rowgrp = tm // _ROW_GROUP
    k_rem = k_total % tk          # 0 -> every K tile is full

    def kernel(neg_ref, out_ref, acc_ref):
        kk = pl.program_id(1)
        is_last = kk == pl.num_programs(1) - 1

        @pl.when(kk == 0)
        def _():
            acc_ref[...] = jnp.zeros_like(acc_ref)

        if k_rem:
            # lane-index pattern for the (single) straddling tail chunk;
            # hoisted so it is built once per step (DCE'd if unused).
            col = jax.lax.broadcasted_iota(jnp.int32, (_ROW_GROUP, chunk_w), 1)

        for r in range(n_rowgrp):
            r0 = r * _ROW_GROUP
            part = acc_ref[r0:r0 + _ROW_GROUP, :]
            for c in range(n_chunks):
                lo = c * chunk_w
                x = neg_ref[r0:r0 + _ROW_GROUP, lo:lo + chunk_w]
                # exp in f32 on every generation -> matches the f32 reference.
                e = jnp.exp(x.astype(jnp.float32))
                if k_rem:
                    if lo + chunk_w <= k_rem:
                        pass                                  # always fully valid
                    elif lo >= k_rem:
                        # chunk entirely past the K tail on the last step
                        e = jnp.where(jnp.logical_not(is_last), e, 0.0)
                    else:
                        # chunk straddles the K tail (static column boundary)
                        keep = jnp.logical_or(jnp.logical_not(is_last),
                                              col < (k_rem - lo))
                        e = jnp.where(keep, e, 0.0)
                # fold chunk_w lanes down onto the 128-lane accumulator (VPU adds)
                for s in range(0, chunk_w, LANE):
                    part = part + e[:, s:s + LANE]
            acc_ref[r0:r0 + _ROW_GROUP, :] = part

        @pl.when(is_last)
        def _():
            # one cross-lane (XLU) reduce + log per row tile, only at the end
            out_ref[...] = jnp.log(
                jnp.sum(acc_ref[...], axis=-1, keepdims=True))

    return kernel


def _log_denominator(neg, tm=None, tk=None):
    """log(sum(exp(neg), axis=-1)) for an (N, K) matrix, computed in Pallas."""
    n, k = neg.shape
    itemsize = jnp.dtype(neg.dtype).itemsize

    # --- K tile: as big as useful, multiple of 128, never above round_up(K) ---
    if tk is None:
        tk = _TK_CAP
    tk = int(max(LANE, min(_round_up(tk, LANE), _round_up(k, LANE))))

    # --- row tile: multiple of 64 (native sublane for f32/bf16/int8); for
    #     small/medium N pick ~N/2 so the "parallel" row axis gives both v7x
    #     TensorCores work (no effect on single-core v5e/v6e). ---
    if tm is None:
        tm = _TM_CAP if n > 2 * _TM_CAP else -(-n // 2)
    tm = int(max(_ROW_GROUP,
                 min(_round_up(tm, _ROW_GROUP), _round_up(n, _ROW_GROUP))))

    grid = (pl.cdiv(n, tm), pl.cdiv(k, tk))

    in_block_bytes = tm * tk * itemsize
    vmem_limit = int(min(48 * 2**20,
                         2 * in_block_bytes + tm * LANE * 4 + (6 << 20)))

    cost = pl.CostEstimate(
        flops=2 * n * k,
        transcendentals=n * k,
        bytes_accessed=n * k * itemsize + n * 4,
    )

    logden = pl.pallas_call(
        _make_logden_kernel(tm, tk, k),
        out_shape=jax.ShapeDtypeStruct((n, 1), jnp.float32),
        grid_spec=pltpu.PrefetchScalarGridSpec(
            num_scalar_prefetch=0,
            grid=grid,
            in_specs=[pl.BlockSpec((tm, tk), lambda i, j: (i, j))],
            out_specs=pl.BlockSpec((tm, 1), lambda i, j: (i, 0)),
            scratch_shapes=[pltpu.VMEM((tm, LANE), jnp.float32)],
        ),
        compiler_params=pltpu.CompilerParams(
            dimension_semantics=("parallel", "arbitrary"),
            vmem_limit_bytes=vmem_limit,
        ),
        cost_estimate=cost,
    )(neg)
    return logden[:, 0]


def contrastive_learning_loss(positive_similarity, negative_similarity,
                              reduction='mean', tm=None, tk=None):
    n, _ = negative_similarity.shape
    assert positive_similarity.shape == (n,)
    logden = _log_denominator(negative_similarity, tm=tm, tk=tk)
    # pos term + mean are trivial -> kept in the wrapper (no 1-lane pos DMA,
    # no serialized scalar accumulation inside the kernel).
    l = logden - positive_similarity.astype(jnp.float32)
    if reduction == 'mean':
        return l.mean()
    return l


def _reference(pos, neg, reduction='mean'):
    den = jnp.sum(jnp.exp(neg.astype(jnp.float32)), axis=-1)
    l = -pos.astype(jnp.float32) + jnp.log(den)
    return l.mean() if reduction == 'mean' else l


if __name__ == "__main__":
    key = jax.random.PRNGKey(0)
    ks = jax.random.split(key, 4)

    # N "true pixels", K = queue + batch samples
    N, K = 128, 256
    pos = jax.random.normal(ks[0], (N,), dtype=jnp.float32)
    neg = jax.random.normal(ks[1], (N, K), dtype=jnp.float32)

    # reduction='mean' (module default)
    loss = jax.block_until_ready(contrastive_learning_loss(pos, neg))
    ref = _reference(pos, neg, 'mean')
    assert jnp.allclose(loss, ref, rtol=1e-5, atol=1e-5), (loss, ref)

    # reduction='none'
    loss_vec = jax.block_until_ready(
        contrastive_learning_loss(pos, neg, reduction='none'))
    ref_vec = _reference(pos, neg, 'none')
    assert jnp.allclose(loss_vec, ref_vec, rtol=1e-5, atol=1e-5)

    # Ragged N / K exercise the in-kernel tail masking (no HBM padding copy),
    # partial row blocks, and multi-K-step accumulation with full /
    # straddling / dead chunks in the last K tile.
    N2, K2 = 200, 650
    pos2 = jax.random.normal(ks[2], (N2,), dtype=jnp.float32)
    neg2 = jax.random.normal(ks[3], (N2, K2), dtype=jnp.float32)

    loss2 = jax.block_until_ready(
        contrastive_learning_loss(pos2, neg2, reduction='mean', tk=512))
    ref2 = _reference(pos2, neg2, 'mean')
    assert jnp.allclose(loss2, ref2, rtol=1e-5, atol=1e-5), (loss2, ref2)

    loss3 = jax.block_until_ready(
        contrastive_learning_loss(pos2, neg2, reduction='none'))
    ref3 = _reference(pos2, neg2, 'none')
    assert jnp.allclose(loss3, ref3, rtol=1e-5, atol=1e-5)

    print("KERNEL_OK")
</pallas_src>

<mosaic_0001>
module attributes {stable_mosaic.version = 11 : i64} {
  func.func @kernel(%arg0: i32, %arg1: i32, %arg2: memref<64x256xf32, #tpu.memory_space<vmem>>, %arg3: memref<64x1xf32, #tpu.memory_space<vmem>>, %arg4: memref<64x128xf32, #tpu.memory_space<vmem>>) attributes {dimension_semantics = [#tpu.dimension_semantics<parallel>, #tpu.dimension_semantics<arbitrary>], iteration_bounds = array<i64: 2, 1>, scalar_prefetch = 0 : i64, scratch_operands = 1 : i64, tpu.core_type = #tpu.core_type<tc>, window_params = [{transform_indices = @transform_0, window_bounds = array<i64: 64, 256>}, {transform_indices = @transform_1, window_bounds = array<i64: 64, 1>}]} {
    %c0_i32 = arith.constant 0 : i32
    %0 = arith.cmpi eq, %arg1, %c0_i32 : i32
    %c0_i32_0 = arith.constant 0 : i32
    %1 = arith.cmpi eq, %arg1, %c0_i32_0 : i32
    %2 = arith.extui %1 : i1 to i32
    %c0_i32_1 = arith.constant 0 : i32
    %3 = arith.cmpi ne, %2, %c0_i32_1 : i32
    scf.if %3 {
      %cst = arith.constant 0.000000e+00 : f32
      %14 = vector.broadcast %cst : f32 to vector<64x128xf32>
      %c0_8 = arith.constant 0 : index
      %c0_9 = arith.constant 0 : index
      %15 = vector.load %arg4[%c0_8, %c0_9] : memref<64x128xf32, #tpu.memory_space<vmem>>, vector<64x128xf32>
      tpu.vector_store %arg4[%c0_8, %c0_9], %14 {strides = array<i32>} : memref<64x128xf32, #tpu.memory_space<vmem>>, vector<64x128xf32>,
    } else {
    }
    %c0 = arith.constant 0 : index
    %c0_2 = arith.constant 0 : index
    %4 = vector.load %arg4[%c0, %c0_2] : memref<64x128xf32, #tpu.memory_space<vmem>>, vector<64x128xf32>
    %c0_3 = arith.constant 0 : index
    %c0_4 = arith.constant 0 : index
    %5 = vector.load %arg2[%c0_3, %c0_4] : memref<64x256xf32, #tpu.memory_space<vmem>>, vector<64x256xf32>
    %6 = math.exp %5 : vector<64x256xf32>
    %7 = vector.extract_strided_slice %6 {offsets = [0, 0], sizes = [64, 128], strides = [1, 1]} : vector<64x256xf32> to vector<64x128xf32>
    %8 = arith.addf %4, %7 : vector<64x128xf32>
    %9 = vector.extract_strided_slice %6 {offsets = [0, 128], sizes = [64, 128], strides = [1, 1]} : vector<64x256xf32> to vector<64x128xf32>
    %10 = arith.addf %8, %9 : vector<64x128xf32>
    %c0_5 = arith.constant 0 : index
    %c0_6 = arith.constant 0 : index
    %11 = vector.load %arg4[%c0_5, %c0_6] : memref<64x128xf32, #tpu.memory_space<vmem>>, vector<64x128xf32>
    tpu.vector_store %arg4[%c0_5, %c0_6], %10 {strides = array<i32>} : memref<64x128xf32, #tpu.memory_space<vmem>>, vector<64x128xf32>,
    %12 = arith.extui %0 : i1 to i32
    %c0_i32_7 = arith.constant 0 : i32
    %13 = arith.cmpi ne, %12, %c0_i32_7 : i32
    scf.if %13 {
      %c0_8 = arith.constant 0 : index
      %c0_9 = arith.constant 0 : index
      %14 = vector.load %arg4[%c0_8, %c0_9] : memref<64x128xf32, #tpu.memory_space<vmem>>, vector<64x128xf32>
      %cst = arith.constant dense<0.000000e+00> : vector<64xf32>
      %15 = vector.multi_reduction <add>, %14, %cst [1] : vector<64x128xf32> to vector<64xf32>
      %16 = vector.shape_cast %15 : vector<64xf32> to vector<64x1xf32>
      %17 = math.log %16 : vector<64x1xf32>
      %c0_10 = arith.constant 0 : index
      %c0_11 = arith.constant 0 : index
      %18 = vector.load %arg3[%c0_10, %c0_11] : memref<64x1xf32, #tpu.memory_space<vmem>>, vector<64x1xf32>
      tpu.vector_store %arg3[%c0_10, %c0_11], %17 {strides = array<i32>} : memref<64x1xf32, #tpu.memory_space<vmem>>, vector<64x1xf32>,
    } else {
    }
    return
  }
  func.func @transform_0(%arg0: i32, %arg1: i32) -> (i32, i32) {
    %c0_i32 = arith.constant 0 : i32
    return %arg0, %arg1 : i32, i32
  }
  func.func @transform_1(%arg0: i32, %arg1: i32) -> (i32, i32) {
    %c0_i32 = arith.constant 0 : i32
    %c0_i32_0 = arith.constant 0 : i32
    return %arg0, %c0_i32 : i32, i32
  }
}

</mosaic_0001>

<llo_original>
// kernel: tpu_custom_call.1
$region0: #{tpu_custom_call.1}
  #allocation0 [shape = 'u32[]', space=smem, size = 0x4, offset = 0x4, fixed_abs, tag = 'smem constant byte address 0x4 - core index']
  #allocation1 [shape = 'u32[144,128]{1,0:T(1,128)}', space=vmem, size = 0x12000, scoped, tag = 'internal scratch']
  #allocation2 [shape = 'f32[64,128]{1,0:T(8,128)}', space=vmem, size = 0x8000, scoped, tag = 'scratch operand']
  %s0 = inlined_call_operand.hbm [shape: f32[128,256], index: 0, kind: input, shape index: {}]
  %s1 = inlined_call_operand.vmem [shape: f32[128,1], index: 1, kind: output, shape index: {}]
  %s2 = sld [smem:[#allocation0]]
  $region49: #{tpu_custom_call.1} parent=0
    _
  %s4 = ssub.s32 1, %s2
  %s5 = scalar_select 0, %s4, %s2
  $region1: #{tpu_custom_call.1} parent=0
    #allocation3 [shape = 'u8[131072]{0}', space=vmem, size = 0x20000, scoped, tag = 'input window, operand 0']
    #allocation4 [shape = 's32[2]{0}', space=sflag, size = 0x8, scoped, tag = 'scoped memory for tpu_custom_call.1']
    %6 = vsyncpa [#allocation4], 0
    %s7 = scalar_lea.sflag [#allocation4], 1
    %8 = vsyncpa %s7, 0
    loop: start=0, step=1, limit=4
    $region2: #{tpu_custom_call.1} parent=1 // loop_pre_header
      _
    $region3: #{tpu_custom_call.1} parent=1 // loop_header
      %s10 = sphi 0, %s14
      %p11 = scmp.ge.s32.totalorder %s10, 4
      %s17 = sphi 0, %s29
      %s18 = sphi 0, %s25
      %s19 = sphi 0, %s17
      %s20 = sphi 0, %s18
      %s21 = sphi 0, %s19
      %s22 = sphi 0, %s20
      %s34 = sphi 0, %s36
      %s37 = sphi 0, %s34
      %s38 = sphi 0, %s37
      %s54 = sphi 0, %s38
      %s60 = sphi 0, %s62
      %s63 = sphi 0, %s60
      %s64 = sphi 0, %s63
      %s80 = sphi 0, %s64
    $region4: #{tpu_custom_call.1} parent=1 // loop_header_branch
      %13 = sbr.rel (%p11) target = $region8
    $region5: #{tpu_custom_call.1} parent=1 // loop_body
      %s15 = ssub.s32 %s10, 1
      %s16 = ssub.s32 %s10, 2
      %s23 = sadd.s32 1, %s18
      %p24 = scmp.ge.s32.totalorder %s23, 1
      %s25 = scalar_select %p24, 0, %s23
      %s26 = sadd.s32 1, %s17
      %s27 = scalar_select %p24, %s26, %s17
      %p28 = scmp.ge.s32.totalorder %s27, 2
      %s29 = scalar_select %p28, 0, %s27
      %s30 = ssub.s32 %s17, %s29
      %s31 = ssub.s32 %s18, %s25
      %s32 = sor.u32 %s30, %s31
      %p33 = scmp.eq.s32.totalorder %s32, 0
      %s35 = sadd.s32 %s34, 1
      %s36 = scalar_select %p33, %s34, %s35
      %p39 = pneg %p33
      %p40 = scmp.eq.s32.totalorder %s10, 1
      %p41 = por %p39, %p40
      %p42 = scmp.ne.s32.totalorder %s34, %s37
      %p43 = scmp.eq.s32.totalorder %s10, 0
      %p44 = por %p42, %p43
      %p45 = scmp.ne.s32.totalorder %s34, %s37
      %p46 = scmp.eq.s32.totalorder %s15, 1
      %p47 = por %p45, %p46
      %p48 = scmp.ne.s32.totalorder %s37, %s38
      %p49 = scmp.eq.s32.totalorder %s15, 0
      %p50 = por %p48, %p49
      %p51 = scmp.ne.s32.totalorder %s37, %s38
      %p52 = scmp.eq.s32.totalorder %s16, 1
      %p53 = por %p51, %p52
      %p55 = scmp.ne.s32.totalorder %s38, %s54
      %p56 = scmp.eq.s32.totalorder %s16, 0
      %p57 = por %p55, %p56
      %s58 = ssub.s32 %s17, %s29
      %p59 = scmp.eq.s32.totalorder %s58, 0
      %s61 = sadd.s32 %s60, 1
      %s62 = scalar_select %p59, %s60, %s61
      %p65 = pneg %p59
      %p66 = scmp.eq.s32.totalorder %s10, 1
      %p67 = por %p65, %p66
      %p68 = scmp.ne.s32.totalorder %s60, %s63
      %p69 = scmp.eq.s32.totalorder %s10, 0
      %p70 = por %p68, %p69
      %p71 = scmp.ne.s32.totalorder %s60, %s63
      %p72 = scmp.eq.s32.totalorder %s15, 1
      %p73 = por %p71, %p72
      %p74 = scmp.ne.s32.totalorder %s63, %s64
      %p75 = scmp.eq.s32.totalorder %s15, 0
      %p76 = por %p74, %p75
      %p77 = scmp.ne.s32.totalorder %s63, %s64
      %p78 = scmp.eq.s32.totalorder %s16, 1
      %p79 = por %p77, %p78
      %p81 = scmp.ne.s32.totalorder %s64, %s80
      %p82 = scmp.eq.s32.totalorder %s16, 0
      %p83 = por %p81, %p82
      %p84 = scmp.le.s32.totalorder 1, %s10
      %p85 = scmp.lt.s32.totalorder %s10, 3
      %p86 = pnand %p84, %p85
      %p87 = pneg %p86
      // Predicated region
      $region9: #{tpu_custom_call.1} parent=5 // pred_check
        _
      $region10: #{tpu_custom_call.1} parent=5 // pred_check_branch
        %89 = sbr.rel (%p86) target = $region12
      $region11: #{tpu_custom_call.1} parent=5 // pred_region
        %s90 = ssub.s32 %s10, 1
      $region12: #{tpu_custom_call.1} parent=5 // pred_fallthru
        _
      %p91 = scmp.lt.s32.totalorder %s10, 2
      // Predicated region
      $region13: #{tpu_custom_call.1} parent=5 // pred_check
        %p92 = pneg %p91
      $region14: #{tpu_custom_call.1} parent=5 // pred_check_branch
        %94 = sbr.rel (%p92) target = $region16
      $region15: #{tpu_custom_call.1} parent=5 // pred_region
        // Predicated region
        $region17: #{tpu_custom_call.1} parent=15 // pred_check
          %p95 = pneg %p44
        $region18: #{tpu_custom_call.1} parent=15 // pred_check_branch
          %97 = sbr.rel (%p95) target = $region20
        $region19: #{tpu_custom_call.1} parent=15 // pred_region
          %s98 = sand.u32 %s34, 1
          %s99 = scalar_lea.sflag [#allocation4], %s98
          %s100 = sand.u32 %s34, 1
          %s101 = smul.addr %s100, 128
          %s102 = scalar_lea.vmem [#allocation3], %s101
          %s103 = smul.u32 8, %s17
          %s104 = smul.u32 2, %s18
          %s106 = ssub.s32 2048, 2048
          %107 = vsyncadd %s99, %s106
          %s108 = smul.addr %s103, 2
          %s109 = sadd.s32 %s104, %s108
          %s110 = smul.addr %s109, 128
          %s111 = scalar_lea.hbm %s0, %s110
          %s112 = sshll.u32 %s102, 4
          %s113 = int_to_ptr.vmem [resolvable:$true] %s112
          %118 = dma.hbm_to_vmem [thread:$0]  %s111, 2048, %s113, %s99, 256, 256, 16
        $region20: #{tpu_custom_call.1} parent=15 // pred_fallthru
          _
      $region16: #{tpu_custom_call.1} parent=5 // pred_fallthru
        _
      %p119 = scmp.le.s32.totalorder 1, %s10
      %p120 = scmp.lt.s32.totalorder %s10, 3
      %p121 = pnand %p119, %p120
      %p122 = pneg %p121
      // Predicated region
      $region21: #{tpu_custom_call.1} parent=5 // pred_check
        _
      $region22: #{tpu_custom_call.1} parent=5 // pred_check_branch
        %124 = sbr.rel (%p121) target = $region24
      $region23: #{tpu_custom_call.1} parent=5 // pred_region
        %s125 = ssub.s32 %s10, 1
        %s126 = sand.u32 %s37, 1
        %s127 = scalar_lea.sflag [#allocation4], %s126
        %s128 = sand.u32 %s37, 1
        %s129 = smul.addr %s128, 128
        %s130 = scalar_lea.vmem [#allocation3], %s129
        // Predicated region
        $region25: #{tpu_custom_call.1} parent=23 // pred_check
          %p131 = pneg %p50
        $region26: #{tpu_custom_call.1} parent=23 // pred_check_branch
          %133 = sbr.rel (%p131) target = $region28
        $region27: #{tpu_custom_call.1} parent=23 // pred_region
          %134 = dma.done %s127, 2048
        $region28: #{tpu_custom_call.1} parent=23 // pred_fallthru
          _
        %s135 = sand.u32 %s37, 1
        %s136 = scalar_lea.sflag [#allocation4], %s135
        %s137 = sand.u32 %s37, 1
        %s138 = smul.addr %s137, 128
        %s139 = scalar_lea.vmem [#allocation3], %s138
        %p140 = pneg %p50
        %p141 = pneg %p47
        %p142 = pneg %p76
        %p143 = pneg %p73
        %s144 = smul.u32 8, %s19
        %p145 = scmp.lt.s32.totalorder %s144, 15
        %s146 = scalar_select %p145, %s144, 15
        %s147 = smul.addr %s146, 8
        %s148 = scalar_lea.vmem %s1, %s147
        %s149 = smul.u32 8, %s19
        %s150 = smul.u32 2, %s20
        %s151 = smul.u32 8, %s19
        %p152 = scmp.lt.s32.totalorder %s151, 15
        %s153 = scalar_select %p152, %s151, 15
        %s154 = smul.addr %s153, 8
        %s155 = scalar_lea.vmem %s1, %s154
        %s156 = smul.u32 8, %s19
        %p157 = scmp.eq.s32.totalorder %s20, 0
        // Predicated region
        $region29: #{tpu_custom_call.1} parent=23 // pred_check
          %p158 = pneg %p157
        $region30: #{tpu_custom_call.1} parent=23 // pred_check_branch
          %160 = sbr.rel (%p158) target = $region32
        $region31: #{tpu_custom_call.1} parent=23 // pred_region
          %161 = vst [vmem:[#allocation2] sm:$0xff] 0.0
          %162 = vst [vmem:[#allocation2 + $0x8] sm:$0xff] 0.0
          %163 = vst [vmem:[#allocation2 + $0x10] sm:$0xff] 0.0
          %164 = vst [vmem:[#allocation2 + $0x18] sm:$0xff] 0.0
          %165 = vst [vmem:[#allocation2 + $0x20] sm:$0xff] 0.0
          %166 = vst [vmem:[#allocation2 + $0x28] sm:$0xff] 0.0
          %167 = vst [vmem:[#allocation2 + $0x30] sm:$0xff] 0.0
          %168 = vst [vmem:[#allocation2 + $0x38] sm:$0xff] 0.0
        $region32: #{tpu_custom_call.1} parent=23 // pred_fallthru
          _
        %v169 = vld [vmem:[#allocation2] sm:$0xff]
        %v170 = vld [vmem:[#allocation2 + $0x8] sm:$0xff]
        %v171 = vld [vmem:[#allocation2 + $0x10] sm:$0xff]
        %v172 = vld [vmem:[#allocation2 + $0x18] sm:$0xff]
        %v173 = vld [vmem:[#allocation2 + $0x20] sm:$0xff]
        %v174 = vld [vmem:[#allocation2 + $0x28] sm:$0xff]
        %v175 = vld [vmem:[#allocation2 + $0x30] sm:$0xff]
        %v176 = vld [vmem:[#allocation2 + $0x38] sm:$0xff]
        %v177 = vld [vmem:[%s130] sm:$0xff]
        %v178 = vld [vmem:[%s130 + $0x8] sm:$0xff]
        %v179 = vld [vmem:[%s130 + $0x10] sm:$0xff]
        %v180 = vld [vmem:[%s130 + $0x18] sm:$0xff]
        %v181 = vld [vmem:[%s130 + $0x20] sm:$0xff]
        %v182 = vld [vmem:[%s130 + $0x28] sm:$0xff]
        %v183 = vld [vmem:[%s130 + $0x30] sm:$0xff]
        %v184 = vld [vmem:[%s130 + $0x38] sm:$0xff]
        %v185 = vld [vmem:[%s130 + $0x40] sm:$0xff]
        %v186 = vld [vmem:[%s130 + $0x48] sm:$0xff]
        %v187 = vld [vmem:[%s130 + $0x50] sm:$0xff]
        %v188 = vld [vmem:[%s130 + $0x58] sm:$0xff]
        %v189 = vld [vmem:[%s130 + $0x60] sm:$0xff]
        %v190 = vld [vmem:[%s130 + $0x68] sm:$0xff]
        %v191 = vld [vmem:[%s130 + $0x70] sm:$0xff]
        %v192 = vld [vmem:[%s130 + $0x78] sm:$0xff]
        %v193 = vmul.f32 %v177, 1.442695
        %v194 = vpow.pop %v193
        %v195 = vmul.f32 %v178, 1.442695
        %v196 = vpow.pop %v195
        %v197 = vmul.f32 %v179, 1.442695
        %v198 = vpow.pop %v197
        %v199 = vmul.f32 %v180, 1.442695
        %v200 = vpow.pop %v199
        %v201 = vmul.f32 %v181, 1.442695
        %v202 = vpow.pop %v201
        %v203 = vmul.f32 %v182, 1.442695
        %v204 = vpow.pop %v203
        %v205 = vmul.f32 %v183, 1.442695
        %v206 = vpow.pop %v205
        %v207 = vmul.f32 %v184, 1.442695
        %v208 = vpow.pop %v207
        %v209 = vmul.f32 %v185, 1.442695
        %v210 = vpow.pop %v209
        %v211 = vmul.f32 %v186, 1.442695
        %v212 = vpow.pop %v211
        %v213 = vmul.f32 %v187, 1.442695
        %v214 = vpow.pop %v213
        %v215 = vmul.f32 %v188, 1.442695
        %v216 = vpow.pop %v215
        %v217 = vmul.f32 %v189, 1.442695
        %v218 = vpow.pop %v217
        %v219 = vmul.f32 %v190, 1.442695
        %v220 = vpow.pop %v219
        %v221 = vmul.f32 %v191, 1.442695
        %v222 = vpow.pop %v221
        %v223 = vmul.f32 %v192, 1.442695
        %v224 = vpow.pop %v223
        %v225 = vadd.f32 %v169, %v194
        %v226 = vadd.f32 %v170, %v198
        %v227 = vadd.f32 %v171, %v202
        %v228 = vadd.f32 %v172, %v206
        %v229 = vadd.f32 %v173, %v210
        %v230 = vadd.f32 %v174, %v214
        %v231 = vadd.f32 %v175, %v218
        %v232 = vadd.f32 %v176, %v222
        %v233 = vadd.f32 %v225, %v196
        %v234 = vadd.f32 %v226, %v200
        %v235 = vadd.f32 %v227, %v204
        %v236 = vadd.f32 %v228, %v208
        %v237 = vadd.f32 %v229, %v212
        %v238 = vadd.f32 %v230, %v216
        %v239 = vadd.f32 %v231, %v220
        %v240 = vadd.f32 %v232, %v224
        %241 = vst [vmem:[#allocation2] sm:$0xff] %v233
        %242 = vst [vmem:[#allocation2 + $0x8] sm:$0xff] %v234
        %243 = vst [vmem:[#allocation2 + $0x10] sm:$0xff] %v235
        %244 = vst [vmem:[#allocation2 + $0x18] sm:$0xff] %v236
        %245 = vst [vmem:[#allocation2 + $0x20] sm:$0xff] %v237
        %246 = vst [vmem:[#allocation2 + $0x28] sm:$0xff] %v238
        %247 = vst [vmem:[#allocation2 + $0x30] sm:$0xff] %v239
        %248 = vst [vmem:[#allocation2 + $0x38] sm:$0xff] %v240
        // Predicated region
        $region33: #{tpu_custom_call.1} parent=23 // pred_check
          %p249 = pneg %p157
        $region34: #{tpu_custom_call.1} parent=23 // pred_check_branch
          %251 = sbr.rel (%p249) target = $region36
        $region35: #{tpu_custom_call.1} parent=23 // pred_region
          %v252 = vld [vmem:[#allocation2] sm:$0xff]
          %v253 = vld [vmem:[#allocation2 + $0x8] sm:$0xff]
          %v254 = vld [vmem:[#allocation2 + $0x10] sm:$0xff]
          %v255 = vld [vmem:[#allocation2 + $0x18] sm:$0xff]
          %v256 = vld [vmem:[#allocation2 + $0x20] sm:$0xff]
          %v257 = vld [vmem:[#allocation2 + $0x28] sm:$0xff]
          %v258 = vld [vmem:[#allocation2 + $0x30] sm:$0xff]
          %v259 = vld [vmem:[#allocation2 + $0x38] sm:$0xff]
          %260 = vadd.xlane.f32.xlu0 %v252
          %v261 = vpop.xlane.xlu0 %260
          %262 = vadd.xlane.f32.xlu0 %v253
          %v263 = vpop.xlane.xlu0 %262
          %264 = vadd.xlane.f32.xlu0 %v254
          %v265 = vpop.xlane.xlu0 %264
          %266 = vadd.xlane.f32.xlu0 %v255
          %v267 = vpop.xlane.xlu0 %266
          %268 = vadd.xlane.f32.xlu0 %v256
          %v269 = vpop.xlane.xlu0 %268
          %270 = vadd.xlane.f32.xlu0 %v257
          %v271 = vpop.xlane.xlu0 %270
          %272 = vadd.xlane.f32.xlu0 %v258
          %v273 = vpop.xlane.xlu0 %272
          %274 = vadd.xlane.f32.xlu0 %v259
          %v275 = vpop.xlane.xlu0 %274
          %v276 = vlog2.pop %v261
          %v277 = vmul.f32 %v276, 0.6931472
          %v278 = vlog2.pop %v263
          %v279 = vmul.f32 %v278, 0.6931472
          %v280 = vlog2.pop %v265
          %v281 = vmul.f32 %v280, 0.6931472
          %v282 = vlog2.pop %v267
          %v283 = vmul.f32 %v282, 0.6931472
          %v284 = vlog2.pop %v269
          %v285 = vmul.f32 %v284, 0.6931472
          %v286 = vlog2.pop %v271
          %v287 = vmul.f32 %v286, 0.6931472
          %v288 = vlog2.pop %v273
          %v289 = vmul.f32 %v288, 0.6931472
          %v290 = vlog2.pop %v275
          %v291 = vmul.f32 %v290, 0.6931472
          %vm292 = vcmask 7168
          %293 = vst.msk [vmem:[%s155] sm:$0xff] %vm292, %v277
          %294 = vst.msk [vmem:[%s155 + $0x8] sm:$0xff] %vm292, %v279
          %295 = vst.msk [vmem:[%s155 + $0x10] sm:$0xff] %vm292, %v281
          %296 = vst.msk [vmem:[%s155 + $0x18] sm:$0xff] %vm292, %v283
          %297 = vst.msk [vmem:[%s155 + $0x20] sm:$0xff] %vm292, %v285
          %298 = vst.msk [vmem:[%s155 + $0x28] sm:$0xff] %vm292, %v287
          %299 = vst.msk [vmem:[%s155 + $0x30] sm:$0xff] %vm292, %v289
          %300 = vst.msk [vmem:[%s155 + $0x38] sm:$0xff] %vm292, %v291
        $region36: #{tpu_custom_call.1} parent=23 // pred_fallthru
          _
        %s301 = smul.u32 8, %s19
        %p302 = scmp.lt.s32.totalorder %s301, 15
        %s303 = scalar_select %p302, %s301, 15
        %s304 = smul.addr %s303, 8
        %s305 = scalar_lea.vmem %s1, %s304
        // Predicated region
        $region37: #{tpu_custom_call.1} parent=23 // pred_check
          %p306 = pneg %p73
        $region38: #{tpu_custom_call.1} parent=23 // pred_check_branch
          %308 = sbr.rel (%p306) target = $region40
        $region39: #{tpu_custom_call.1} parent=23 // pred_region
          %s309 = smul.u32 8, %s19
        $region40: #{tpu_custom_call.1} parent=23 // pred_fallthru
          _
      $region24: #{tpu_custom_call.1} parent=5 // pred_fallthru
        _
      %p310 = scmp.le.s32.totalorder 2, %s10
      // Predicated region
      $region41: #{tpu_custom_call.1} parent=5 // pred_check
        %p311 = pneg %p310
      $region42: #{tpu_custom_call.1} parent=5 // pred_check_branch
        %313 = sbr.rel (%p311) target = $region44
      $region43: #{tpu_custom_call.1} parent=5 // pred_region
        %s314 = ssub.s32 %s10, 2
        // Predicated region
        $region45: #{tpu_custom_call.1} parent=43 // pred_check
          %p315 = pneg %p79
        $region46: #{tpu_custom_call.1} parent=43 // pred_check_branch
          %317 = sbr.rel (%p315) target = $region48
        $region47: #{tpu_custom_call.1} parent=43 // pred_region
          %s318 = smul.u32 8, %s21
          %p319 = scmp.lt.s32.totalorder %s318, 15
          %s320 = scalar_select %p319, %s318, 15
          %s321 = smul.addr %s320, 8
          %s322 = scalar_lea.vmem %s1, %s321
        $region48: #{tpu_custom_call.1} parent=43 // pred_fallthru
          _
      $region44: #{tpu_custom_call.1} parent=5 // pred_fallthru
        _
    $region6: #{tpu_custom_call.1} parent=1 // loop_footer
      %s14 = sadd.s32 1, %s10
    $region7: #{tpu_custom_call.1} parent=1 // loop_footer_branch
      %9 = sbr.rel target = $region3
    $region8: #{tpu_custom_call.1} parent=1 // loop_exit
      _
    %323 = vsyncpa [#allocation4], 1
    %s324 = scalar_lea.sflag [#allocation4], 1
    %325 = vsyncpa %s324, 1

</llo_original>
